<compile_context>
chip_gen: v6e
topology: v6e:2x2x1
jax: 0.10.0
libtpu: 0.0.40
codegen_flags: <defaults>
</compile_context>

<pallas_src>
import functools

import jax
import jax.numpy as jnp
from jax.experimental import pallas as pl
from jax.experimental.pallas import tpu as pltpu

LN_EPS = 1e-12


# ---------------------------------------------------------------------------
# Fused kernel.  All tensors channels-first / tokens-on-lanes:
#   x_ref   : (Cin,  BN)  flattened table, BN = B*S*S tokens on the lane axis
#   sc_ref  : (4,    BN)  neighbor scales [left, right, up, down]
#                         (boundary & batch-wrap zeros baked in)
#   w1_ref  : (Cin,  Cin) dense1 weight (torch layout: out x in)
#   bg1_ref : (Cin,  2)   [:,0] = dense1 bias, [:,1] = T5LayerNorm1 weight
#   w2_ref  : (Cout, Cin) dense2 weight
#   bg2_ref : (Cout, 2)
#   o_ref   : (Cout, BN)  output (lane-dense store)
# ---------------------------------------------------------------------------
def gat_fused_kernel(x_ref, sc_ref, w1_ref, bg1_ref, w2_ref, bg2_ref, o_ref,
                     *, seq, eps):
    bn = x_ref.shape[1]
    sc = sc_ref[...]                 # (4, BN): one direction per sublane
    tl = sc[0:1, :]                  # left  neighbor scale  t[b, j-1] (0 at j==0  / wrap)
    tr = sc[1:2, :]                  # right neighbor scale  t[b, j+1] (0 at j==S-1/ wrap)
    au = sc[2:3, :]                  # up    neighbor scale  a[b, i-1] (0 at i==0  / wrap)
    ad = sc[3:4, :]                  # down  neighbor scale  a[b, i+1] (0 at i==S-1/ wrap)

    def gether_plus_residual(x):
        # x: (C, BN), tokens on lanes.  Rolls are circular; the wrap-around and
        # grid-boundary contributions are killed by zeros in the scale vectors.
        left  = pltpu.roll(x, 1,        axis=1) * tl   # x[:, p-1] * t[b, j-1]
        right = pltpu.roll(x, bn - 1,   axis=1) * tr   # x[:, p+1] * t[b, j+1]
        up    = pltpu.roll(x, seq,      axis=1) * au   # x[:, p-S] * a[b, i-1]
        down  = pltpu.roll(x, bn - seq, axis=1) * ad   # x[:, p+S] * a[b, i+1]
        # gether(x) + x residual  =  2*x + neighbor contributions
        return 2.0 * x + left + right + up + down

    def dense_norm_relu(x, w, bg):
        b = bg[:, 0:1]                                    # (Cout, 1)
        g = bg[:, 1:2]                                    # (Cout, 1)
        # y^T = W @ x^T + b  (x is channels-first: (Cin, BN) -> (Cout, BN))
        y = jnp.dot(w, x, preferred_element_type=jnp.float32) + b
        # T5LayerNorm (RMS norm over channels = sublane axis), then ReLU.
        var = jnp.mean(y * y, axis=0, keepdims=True)      # (1, BN)
        yn = y * jax.lax.rsqrt(var + eps) * g
        return jnp.maximum(yn, 0.0)

    h1 = dense_norm_relu(gether_plus_residual(x_ref[...]), w1_ref[...], bg1_ref[...])
    h2 = dense_norm_relu(gether_plus_residual(h1), w2_ref[...], bg2_ref[...])
    o_ref[...] = h2.astype(o_ref.dtype)


# ---------------------------------------------------------------------------
# Glue: per-token neighbor scale vectors.  For token p = b*S*S + i*S + j:
#   tl[p] = t[b, j-1] if j>0    else 0      (left  neighbor)
#   tr[p] = t[b, j+1] if j<S-1  else 0      (right neighbor)
#   au[p] = a[b, i-1] if i>0    else 0      (up    neighbor)
#   ad[p] = a[b, i+1] if i<S-1  else 0      (down  neighbor)
# The zeros also kill the circular-roll wrap-around across grid and batch
# boundaries (batch boundaries coincide with i==0 / i==S-1 / j==0 rows).
# Returned packed as a single (4, B*S*S) array.
# ---------------------------------------------------------------------------
def build_gether_scales(a_simi, t_simi):
    B, S = a_simi.shape
    idx = jnp.arange(S)
    t_prev = jnp.where(idx >= 1,     jnp.roll(t_simi, 1, axis=1), 0.0)   # t[b, j-1]
    t_next = jnp.where(idx <= S - 2, jnp.roll(t_simi, -1, axis=1), 0.0)  # t[b, j+1]
    a_prev = jnp.where(idx >= 1,     jnp.roll(a_simi, 1, axis=1), 0.0)   # a[b, i-1]
    a_next = jnp.where(idx <= S - 2, jnp.roll(a_simi, -1, axis=1), 0.0)  # a[b, i+1]

    tl = jnp.broadcast_to(t_prev[:, None, :], (B, S, S))   # depends on j only
    tr = jnp.broadcast_to(t_next[:, None, :], (B, S, S))
    au = jnp.broadcast_to(a_prev[:, :, None], (B, S, S))   # depends on i only
    ad = jnp.broadcast_to(a_next[:, :, None], (B, S, S))

    stacked = jnp.stack([tl, tr, au, ad], axis=0)           # (4, B, S, S)
    return stacked.reshape(4, B * S * S).astype(jnp.float32)


@jax.jit
def gat_forward(table, a_simi, t_simi, params):
    """Pallas-backed forward of the GAT module.  table: (B, S, S, Cin)."""
    B, S, S2, Cin = table.shape
    assert S == S2
    BN = B * S * S
    Cout = params["w2"].shape[0]

    x0 = table.reshape(BN, Cin).T.astype(jnp.float32)        # (Cin, BN): tokens on lanes
    scales = build_gether_scales(a_simi, t_simi)              # (4, BN)
    bg1 = jnp.stack([params["b1"], params["ln1"]], axis=1).astype(jnp.float32)  # (Cin, 2)
    bg2 = jnp.stack([params["b2"], params["ln2"]], axis=1).astype(jnp.float32)  # (Cout, 2)

    flops = 2 * BN * Cin * (Cin + Cout) + 40 * BN * Cin       # matmuls + stencil/norm VPU work
    bytes_accessed = 4 * (Cin * BN + 4 * BN + Cin * Cin + 2 * Cin
                          + Cout * Cin + 2 * Cout + Cout * BN)

    kernel = functools.partial(gat_fused_kernel, seq=S, eps=LN_EPS)
    out_t = pl.pallas_call(
        kernel,
        out_shape=jax.ShapeDtypeStruct((Cout, BN), jnp.float32),
        cost_estimate=pl.CostEstimate(flops=int(flops),
                                      transcendentals=int(2 * BN),
                                      bytes_accessed=int(bytes_accessed)),
        # Whole problem fits one VMEM-resident invocation (no grid): both layers
        # fused, weights DMA'd once, h1 never leaves VMEM.
    )(x0, scales,
      params["w1"].astype(jnp.float32), bg1,
      params["w2"].astype(jnp.float32), bg2)

    return out_t.T.reshape(B, S, S, Cout)


# ---------------------------------------------------------------------------
# Pure-JAX reference (mirrors the PyTorch forward exactly) for validation.
# ---------------------------------------------------------------------------
def _gether_ref(h, a_simi, t_simi):
    B, S, _, D = h.shape
    hy = h * t_simi[:, None, :, None]
    hx = h * a_simi[:, :, None, None]
    zy = jnp.zeros((B, S, 1, D), h.dtype)
    zx = jnp.zeros((B, 1, S, D), h.dtype)
    h_left = jnp.concatenate([zy, hy], axis=2)[:, :, :-1, :]
    h_right = jnp.concatenate([hy, zy], axis=2)[:, :, 1:, :]
    h_up = jnp.concatenate([zx, hx], axis=1)[:, :-1, :, :]
    h_down = jnp.concatenate([hx, zx], axis=1)[:, 1:, :, :]
    return h + h_left + h_right + h_up + h_down


def _t5_norm_ref(x, w, eps=LN_EPS):
    var = jnp.mean(x.astype(jnp.float32) ** 2, axis=-1, keepdims=True)
    return w * (x * jax.lax.rsqrt(var + eps))


def gat_forward_ref(table, a_simi, t_simi, params):
    h0 = table
    h1 = _gether_ref(h0, a_simi, t_simi)
    h1 = jnp.maximum(_t5_norm_ref((h1 + h0) @ params["w1"].T + params["b1"],
                                  params["ln1"]), 0.0)
    h2 = _gether_ref(h1, a_simi, t_simi)
    h2 = jnp.maximum(_t5_norm_ref((h2 + h1) @ params["w2"].T + params["b2"],
                                  params["ln2"]), 0.0)
    return h2


# TODO(synk): self.dropout is declared in __init__ but never used in forward;
# nothing to translate (eval-mode identity anyway).  label_num is also unused.

if __name__ == "__main__":
    # Small shapes consistent with the module: batch=2, seq=8,
    # in_channel=32, out_channel=16 (label_num unused in forward).
    B, S, IN_CH, OUT_CH = 2, 8, 32, 16

    key = jax.random.PRNGKey(0)
    k_tab, k_a, k_t, k_w1, k_b1, k_w2, k_b2 = jax.random.split(key, 7)

    table = jax.random.normal(k_tab, (B, S, S, IN_CH), dtype=jnp.float32)
    a_simi = jax.random.uniform(k_a, (B, S), dtype=jnp.float32)
    t_simi = jax.random.uniform(k_t, (B, S), dtype=jnp.float32)

    params = {
        "w1": jax.random.normal(k_w1, (IN_CH, IN_CH), jnp.float32) * 0.05,
        "b1": jax.random.normal(k_b1, (IN_CH,), jnp.float32) * 0.05,
        "ln1": jnp.ones((IN_CH,), jnp.float32),
        "w2": jax.random.normal(k_w2, (OUT_CH, IN_CH), jnp.float32) * 0.05,
        "b2": jax.random.normal(k_b2, (OUT_CH,), jnp.float32) * 0.05,
        "ln2": jnp.ones((OUT_CH,), jnp.float32),
    }

    out = jax.block_until_ready(gat_forward(table, a_simi, t_simi, params))
    ref = jax.block_until_ready(gat_forward_ref(table, a_simi, t_simi, params))

    assert out.shape == (B, S, S, OUT_CH), out.shape
    max_err = float(jnp.max(jnp.abs(out - ref)))
    assert jnp.allclose(out, ref, atol=1e-4, rtol=1e-4), max_err
    print("KERNEL_OK")
</pallas_src>

<mosaic_0001>
module attributes {stable_mosaic.version = 11 : i64} {
  func.func @gat_fused_kernel(%arg0: memref<32x128xf32, #tpu.memory_space<vmem>>, %arg1: memref<4x128xf32, #tpu.memory_space<vmem>>, %arg2: memref<32x32xf32, #tpu.memory_space<vmem>>, %arg3: memref<32x2xf32, #tpu.memory_space<vmem>>, %arg4: memref<16x32xf32, #tpu.memory_space<vmem>>, %arg5: memref<16x2xf32, #tpu.memory_space<vmem>>, %arg6: memref<16x128xf32, #tpu.memory_space<vmem>>) attributes {dimension_semantics = [], scalar_prefetch = 0 : i64, scratch_operands = 0 : i64, tpu.core_type = #tpu.core_type<tc>} {
    %c0 = arith.constant 0 : index
    %c0_0 = arith.constant 0 : index
    %0 = vector.load %arg1[%c0, %c0_0] : memref<4x128xf32, #tpu.memory_space<vmem>>, vector<4x128xf32>
    %1 = vector.extract_strided_slice %0 {offsets = [0, 0], sizes = [1, 128], strides = [1, 1]} : vector<4x128xf32> to vector<1x128xf32>
    %2 = vector.extract_strided_slice %0 {offsets = [1, 0], sizes = [1, 128], strides = [1, 1]} : vector<4x128xf32> to vector<1x128xf32>
    %3 = vector.extract_strided_slice %0 {offsets = [2, 0], sizes = [1, 128], strides = [1, 1]} : vector<4x128xf32> to vector<1x128xf32>
    %4 = vector.extract_strided_slice %0 {offsets = [3, 0], sizes = [1, 128], strides = [1, 1]} : vector<4x128xf32> to vector<1x128xf32>
    %c0_1 = arith.constant 0 : index
    %c0_2 = arith.constant 0 : index
    %5 = vector.load %arg0[%c0_1, %c0_2] : memref<32x128xf32, #tpu.memory_space<vmem>>, vector<32x128xf32>
    %c1_i32 = arith.constant 1 : i32
    %6 = tpu.dynamic_rotate %5 by %c1_i32 dim 1 : vector<32x128xf32>, i32 -> vector<32x128xf32>
    %7 = vector.broadcast %1 : vector<1x128xf32> to vector<32x128xf32>
    %8 = arith.mulf %6, %7 : vector<32x128xf32>
    %c127_i32 = arith.constant 127 : i32
    %9 = tpu.dynamic_rotate %5 by %c127_i32 dim 1 : vector<32x128xf32>, i32 -> vector<32x128xf32>
    %10 = vector.broadcast %2 : vector<1x128xf32> to vector<32x128xf32>
    %11 = arith.mulf %9, %10 : vector<32x128xf32>
    %c8_i32 = arith.constant 8 : i32
    %12 = tpu.dynamic_rotate %5 by %c8_i32 dim 1 : vector<32x128xf32>, i32 -> vector<32x128xf32>
    %13 = vector.broadcast %3 : vector<1x128xf32> to vector<32x128xf32>
    %14 = arith.mulf %12, %13 : vector<32x128xf32>
    %c120_i32 = arith.constant 120 : i32
    %15 = tpu.dynamic_rotate %5 by %c120_i32 dim 1 : vector<32x128xf32>, i32 -> vector<32x128xf32>
    %16 = vector.broadcast %4 : vector<1x128xf32> to vector<32x128xf32>
    %17 = arith.mulf %15, %16 : vector<32x128xf32>
    %cst = arith.constant 2.000000e+00 : f32
    %18 = vector.broadcast %cst : f32 to vector<32x128xf32>
    %19 = arith.mulf %18, %5 : vector<32x128xf32>
    %20 = arith.addf %19, %8 : vector<32x128xf32>
    %21 = arith.addf %20, %11 : vector<32x128xf32>
    %22 = arith.addf %21, %14 : vector<32x128xf32>
    %23 = arith.addf %22, %17 : vector<32x128xf32>
    %c0_3 = arith.constant 0 : index
    %c0_4 = arith.constant 0 : index
    %24 = vector.load %arg2[%c0_3, %c0_4] : memref<32x32xf32, #tpu.memory_space<vmem>>, vector<32x32xf32>
    %c0_5 = arith.constant 0 : index
    %c0_6 = arith.constant 0 : index
    %25 = vector.load %arg3[%c0_5, %c0_6] : memref<32x2xf32, #tpu.memory_space<vmem>>, vector<32x2xf32>
    %26 = vector.extract_strided_slice %25 {offsets = [0, 0], sizes = [32, 1], strides = [1, 1]} : vector<32x2xf32> to vector<32x1xf32>
    %27 = vector.extract_strided_slice %25 {offsets = [0, 1], sizes = [32, 1], strides = [1, 1]} : vector<32x2xf32> to vector<32x1xf32>
    %cst_7 = arith.constant dense<0.000000e+00> : vector<32x128xf32>
    %28 = tpu.matmul %24, %23, %cst_7 {dimension_numbers = #tpu.dot_dimension_numbers<[1], [0], [0], [1], [0, 0, 1, 1], [], []>} : vector<32x32xf32>, vector<32x128xf32>, vector<32x128xf32> -> vector<32x128xf32>
    %29 = vector.broadcast %26 : vector<32x1xf32> to vector<32x128xf32>
    %30 = arith.addf %28, %29 : vector<32x128xf32>
    %31 = arith.mulf %30, %30 : vector<32x128xf32>
    %cst_8 = arith.constant dense<0.000000e+00> : vector<128xf32>
    %32 = vector.multi_reduction <add>, %31, %cst_8 [0] : vector<32x128xf32> to vector<128xf32>
    %33 = vector.shape_cast %32 : vector<128xf32> to vector<1x128xf32>
    %cst_9 = arith.constant 3.200000e+01 : f32
    %34 = vector.broadcast %cst_9 : f32 to vector<1x128xf32>
    %35 = arith.divf %33, %34 : vector<1x128xf32>
    %cst_10 = arith.constant 9.99999996E-13 : f32
    %36 = vector.broadcast %cst_10 : f32 to vector<1x128xf32>
    %37 = arith.addf %35, %36 : vector<1x128xf32>
    %38 = math.rsqrt %37 : vector<1x128xf32>
    %39 = vector.broadcast %38 : vector<1x128xf32> to vector<32x128xf32>
    %40 = arith.mulf %30, %39 : vector<32x128xf32>
    %41 = vector.broadcast %27 : vector<32x1xf32> to vector<32x128xf32>
    %42 = arith.mulf %40, %41 : vector<32x128xf32>
    %cst_11 = arith.constant 0.000000e+00 : f32
    %43 = vector.broadcast %cst_11 : f32 to vector<32x128xf32>
    %44 = arith.maximumf %42, %43 : vector<32x128xf32>
    %c1_i32_12 = arith.constant 1 : i32
    %45 = tpu.dynamic_rotate %44 by %c1_i32_12 dim 1 : vector<32x128xf32>, i32 -> vector<32x128xf32>
    %46 = vector.broadcast %1 : vector<1x128xf32> to vector<32x128xf32>
    %47 = arith.mulf %45, %46 : vector<32x128xf32>
    %c127_i32_13 = arith.constant 127 : i32
    %48 = tpu.dynamic_rotate %44 by %c127_i32_13 dim 1 : vector<32x128xf32>, i32 -> vector<32x128xf32>
    %49 = vector.broadcast %2 : vector<1x128xf32> to vector<32x128xf32>
    %50 = arith.mulf %48, %49 : vector<32x128xf32>
    %c8_i32_14 = arith.constant 8 : i32
    %51 = tpu.dynamic_rotate %44 by %c8_i32_14 dim 1 : vector<32x128xf32>, i32 -> vector<32x128xf32>
    %52 = vector.broadcast %3 : vector<1x128xf32> to vector<32x128xf32>
    %53 = arith.mulf %51, %52 : vector<32x128xf32>
    %c120_i32_15 = arith.constant 120 : i32
    %54 = tpu.dynamic_rotate %44 by %c120_i32_15 dim 1 : vector<32x128xf32>, i32 -> vector<32x128xf32>
    %55 = vector.broadcast %4 : vector<1x128xf32> to vector<32x128xf32>
    %56 = arith.mulf %54, %55 : vector<32x128xf32>
    %cst_16 = arith.constant 2.000000e+00 : f32
    %57 = vector.broadcast %cst_16 : f32 to vector<32x128xf32>
    %58 = arith.mulf %57, %44 : vector<32x128xf32>
    %59 = arith.addf %58, %47 : vector<32x128xf32>
    %60 = arith.addf %59, %50 : vector<32x128xf32>
    %61 = arith.addf %60, %53 : vector<32x128xf32>
    %62 = arith.addf %61, %56 : vector<32x128xf32>
    %c0_17 = arith.constant 0 : index
    %c0_18 = arith.constant 0 : index
    %63 = vector.load %arg4[%c0_17, %c0_18] : memref<16x32xf32, #tpu.memory_space<vmem>>, vector<16x32xf32>
    %c0_19 = arith.constant 0 : index
    %c0_20 = arith.constant 0 : index
    %64 = vector.load %arg5[%c0_19, %c0_20] : memref<16x2xf32, #tpu.memory_space<vmem>>, vector<16x2xf32>
    %65 = vector.extract_strided_slice %64 {offsets = [0, 0], sizes = [16, 1], strides = [1, 1]} : vector<16x2xf32> to vector<16x1xf32>
    %66 = vector.extract_strided_slice %64 {offsets = [0, 1], sizes = [16, 1], strides = [1, 1]} : vector<16x2xf32> to vector<16x1xf32>
    %cst_21 = arith.constant dense<0.000000e+00> : vector<16x128xf32>
    %67 = tpu.matmul %63, %62, %cst_21 {dimension_numbers = #tpu.dot_dimension_numbers<[1], [0], [0], [1], [0, 0, 1, 1], [], []>} : vector<16x32xf32>, vector<32x128xf32>, vector<16x128xf32> -> vector<16x128xf32>
    %68 = vector.broadcast %65 : vector<16x1xf32> to vector<16x128xf32>
    %69 = arith.addf %67, %68 : vector<16x128xf32>
    %70 = arith.mulf %69, %69 : vector<16x128xf32>
    %cst_22 = arith.constant dense<0.000000e+00> : vector<128xf32>
    %71 = vector.multi_reduction <add>, %70, %cst_22 [0] : vector<16x128xf32> to vector<128xf32>
    %72 = vector.shape_cast %71 : vector<128xf32> to vector<1x128xf32>
    %cst_23 = arith.constant 1.600000e+01 : f32
    %73 = vector.broadcast %cst_23 : f32 to vector<1x128xf32>
    %74 = arith.divf %72, %73 : vector<1x128xf32>
    %cst_24 = arith.constant 9.99999996E-13 : f32
    %75 = vector.broadcast %cst_24 : f32 to vector<1x128xf32>
    %76 = arith.addf %74, %75 : vector<1x128xf32>
    %77 = math.rsqrt %76 : vector<1x128xf32>
    %78 = vector.broadcast %77 : vector<1x128xf32> to vector<16x128xf32>
    %79 = arith.mulf %69, %78 : vector<16x128xf32>
    %80 = vector.broadcast %66 : vector<16x1xf32> to vector<16x128xf32>
    %81 = arith.mulf %79, %80 : vector<16x128xf32>
    %cst_25 = arith.constant 0.000000e+00 : f32
    %82 = vector.broadcast %cst_25 : f32 to vector<16x128xf32>
    %83 = arith.maximumf %81, %82 : vector<16x128xf32>
    %c0_26 = arith.constant 0 : index
    %c0_27 = arith.constant 0 : index
    %84 = vector.load %arg6[%c0_26, %c0_27] : memref<16x128xf32, #tpu.memory_space<vmem>>, vector<16x128xf32>
    tpu.vector_store %arg6[%c0_26, %c0_27], %83 {strides = array<i32>} : memref<16x128xf32, #tpu.memory_space<vmem>>, vector<16x128xf32>,
    return
  }
}

</mosaic_0001>

<llo_original>
// kernel: gat_forward.1
$region0: #{gat_forward.1}
  #allocation0 [shape = 'u32[]', space=smem, size = 0x4, offset = 0x4, fixed_abs, tag = 'smem constant byte address 0x4 - core index']
  #allocation1 [shape = 'u32[144,128]{1,0:T(1,128)}', space=vmem, size = 0x12000, scoped, tag = 'internal scratch']
  %s0 = inlined_call_operand.vmem [shape: f32[32,128], index: 0, kind: input, shape index: {}]
  %s1 = inlined_call_operand.vmem [shape: f32[4,128], index: 1, kind: input, shape index: {}]
  %s2 = inlined_call_operand.vmem [shape: f32[32,32], index: 2, kind: input, shape index: {}]
  %s3 = inlined_call_operand.vmem [shape: f32[32,2], index: 3, kind: input, shape index: {}]
  %s4 = inlined_call_operand.vmem [shape: f32[16,32], index: 4, kind: input, shape index: {}]
  %s5 = inlined_call_operand.vmem [shape: f32[16,2], index: 5, kind: input, shape index: {}]
  %s6 = inlined_call_operand.vmem [shape: f32[16,128], index: 6, kind: output, shape index: {}]
  %s7 = sld [smem:[#allocation0]]
  $region34: #{gat_forward.1} parent=0
    _
  %s9 = ssub.s32 1, %s7
  %s10 = scalar_select 0, %s9, %s7
  // Predicated region
  $region2: #{gat_forward.1} parent=0 // pred_check
    _
  $region3: #{gat_forward.1} parent=0 // pred_check_branch
    %12 = sbr.rel (0) target = $region5
  $region4: #{gat_forward.1} parent=0 // pred_region
    _
  $region5: #{gat_forward.1} parent=0 // pred_fallthru
    _
  // Predicated region
  $region6: #{gat_forward.1} parent=0 // pred_check
    _
  $region7: #{gat_forward.1} parent=0 // pred_check_branch
    %14 = sbr.rel (0) target = $region9
  $region8: #{gat_forward.1} parent=0 // pred_region
    _
  $region9: #{gat_forward.1} parent=0 // pred_fallthru
    _
  // Predicated region
  $region10: #{gat_forward.1} parent=0 // pred_check
    _
  $region11: #{gat_forward.1} parent=0 // pred_check_branch
    %16 = sbr.rel (0) target = $region13
  $region12: #{gat_forward.1} parent=0 // pred_region
    _
  $region13: #{gat_forward.1} parent=0 // pred_fallthru
    _
  // Predicated region
  $region14: #{gat_forward.1} parent=0 // pred_check
    _
  $region15: #{gat_forward.1} parent=0 // pred_check_branch
    %18 = sbr.rel (0) target = $region17
  $region16: #{gat_forward.1} parent=0 // pred_region
    _
  $region17: #{gat_forward.1} parent=0 // pred_fallthru
    _
  // Predicated region
  $region18: #{gat_forward.1} parent=0 // pred_check
    _
  $region19: #{gat_forward.1} parent=0 // pred_check_branch
    %20 = sbr.rel (0) target = $region21
  $region20: #{gat_forward.1} parent=0 // pred_region
    _
  $region21: #{gat_forward.1} parent=0 // pred_fallthru
    _
  // Predicated region
  $region22: #{gat_forward.1} parent=0 // pred_check
    _
  $region23: #{gat_forward.1} parent=0 // pred_check_branch
    %22 = sbr.rel (0) target = $region25
  $region24: #{gat_forward.1} parent=0 // pred_region
    _
  $region25: #{gat_forward.1} parent=0 // pred_fallthru
    _
  %v23 = vld [vmem:[%s1] sm:$0xf]
  %v24 = vld [vmem:[%s0] sm:$0xff]
  %v25 = vld [vmem:[%s0 + $0x8] sm:$0xff]
  %v26 = vld [vmem:[%s0 + $0x10] sm:$0xff]
  %v27 = vld [vmem:[%s0 + $0x18] sm:$0xff]
  %28 = vrot.lane.b32.xlu0 %v24, 1
  %v29 = vpop.permute.xlu0 %28
  %30 = vrot.lane.b32.xlu0 %v25, 1
  %v31 = vpop.permute.xlu0 %30
  %32 = vrot.lane.b32.xlu0 %v26, 1
  %v33 = vpop.permute.xlu0 %32
  %34 = vrot.lane.b32.xlu0 %v27, 1
  %v35 = vpop.permute.xlu0 %34
  %v36 = vlaneseq
  %v37 = vshrl.u32 %v36, 7
  %v38 = vsub.s32 0, %v37
  %v39 = vrot.slane %v23, %v38
  %v40 = vmul.f32 %v29, %v39
  %v41 = vmul.f32 %v31, %v39
  %v42 = vmul.f32 %v33, %v39
  %v43 = vmul.f32 %v35, %v39
  %44 = vrot.lane.b32.xlu0 %v24, 127
  %v45 = vpop.permute.xlu0 %44
  %46 = vrot.lane.b32.xlu0 %v25, 127
  %v47 = vpop.permute.xlu0 %46
  %48 = vrot.lane.b32.xlu0 %v26, 127
  %v49 = vpop.permute.xlu0 %48
  %50 = vrot.lane.b32.xlu0 %v27, 127
  %v51 = vpop.permute.xlu0 %50
  %v52 = vlaneseq
  %v53 = vshrl.u32 %v52, 7
  %v54 = vsub.s32 1, %v53
  %v55 = vrot.slane %v23, %v54
  %v56 = vmul.f32 %v45, %v55
  %v57 = vmul.f32 %v47, %v55
  %v58 = vmul.f32 %v49, %v55
  %v59 = vmul.f32 %v51, %v55
  %60 = vrot.lane.b32.xlu0 %v24, 8
  %v61 = vpop.permute.xlu0 %60
  %62 = vrot.lane.b32.xlu0 %v25, 8
  %v63 = vpop.permute.xlu0 %62
  %64 = vrot.lane.b32.xlu0 %v26, 8
  %v65 = vpop.permute.xlu0 %64
  %66 = vrot.lane.b32.xlu0 %v27, 8
  %v67 = vpop.permute.xlu0 %66
  %v68 = vlaneseq
  %v69 = vshrl.u32 %v68, 7
  %v70 = vsub.s32 2, %v69
  %v71 = vrot.slane %v23, %v70
  %v72 = vmul.f32 %v61, %v71
  %v73 = vmul.f32 %v63, %v71
  %v74 = vmul.f32 %v65, %v71
  %v75 = vmul.f32 %v67, %v71
  %76 = vrot.lane.b32.xlu0 %v24, 120
  %v77 = vpop.permute.xlu0 %76
  %78 = vrot.lane.b32.xlu0 %v25, 120
  %v79 = vpop.permute.xlu0 %78
  %80 = vrot.lane.b32.xlu0 %v26, 120
  %v81 = vpop.permute.xlu0 %80
  %82 = vrot.lane.b32.xlu0 %v27, 120
  %v83 = vpop.permute.xlu0 %82
  %v84 = vlaneseq
  %v85 = vshrl.u32 %v84, 7
  %v86 = vsub.s32 3, %v85
  %v87 = vrot.slane %v23, %v86
  %v88 = vmul.f32 %v77, %v87
  %v89 = vmul.f32 %v79, %v87
  %v90 = vmul.f32 %v81, %v87
  %v91 = vmul.f32 %v83, %v87
  %v92 = vmul.f32 %v24, 2.0
  %v93 = vmul.f32 %v25, 2.0
  %v94 = vmul.f32 %v26, 2.0
  %v95 = vmul.f32 %v27, 2.0
  %v96 = vadd.f32 %v92, %v40
  %v97 = vadd.f32 %v93, %v41
  %v98 = vadd.f32 %v94, %v42
  %v99 = vadd.f32 %v95, %v43
  %v100 = vadd.f32 %v96, %v56
  %v101 = vadd.f32 %v97, %v57
  %v102 = vadd.f32 %v98, %v58
  %v103 = vadd.f32 %v99, %v59
  %v104 = vadd.f32 %v100, %v72
  %v105 = vadd.f32 %v101, %v73
  %v106 = vadd.f32 %v102, %v74
  %v107 = vadd.f32 %v103, %v75
  %v108 = vadd.f32 %v104, %v88
  %v109 = vadd.f32 %v105, %v89
  %v110 = vadd.f32 %v106, %v90
  %v111 = vadd.f32 %v107, %v91
  %v112 = vld [vmem:[%s2] sm:$0xff]
  %v113 = vld [vmem:[%s2 + $0x8] sm:$0xff]
  %v114 = vld [vmem:[%s2 + $0x10] sm:$0xff]
  %v115 = vld [vmem:[%s2 + $0x18] sm:$0xff]
  %v116 = vld [vmem:[%s3] sm:$0xff]
  %v117 = vld [vmem:[%s3 + $0x8] sm:$0xff]
  %v118 = vld [vmem:[%s3 + $0x10] sm:$0xff]
  %v119 = vld [vmem:[%s3 + $0x18] sm:$0xff]
  %121 = vset.pattern.permute.xlu0 0
  %122 = vperm.xlu0 %121, %v116
  %v123 = vpop.permute.xlu0 %122
  %126 = vset.pattern.permute.xlu0 0
  %127 = vperm.xlu0 %126, %v117
  %v128 = vpop.permute.xlu0 %127
  %131 = vset.pattern.permute.xlu0 0
  %132 = vperm.xlu0 %131, %v118
  %v133 = vpop.permute.xlu0 %132
  %136 = vset.pattern.permute.xlu0 0
  %137 = vperm.xlu0 %136, %v119
  %v138 = vpop.permute.xlu0 %137
  %vm140 = vcmask 261120
  %v142 = vsel %vm140, %v112, 0
  %v145 = vsel %vm140, %v113, 0
  %v148 = vsel %vm140, %v114, 0
  %v151 = vsel %vm140, %v115, 0
  %153 = vmatprep.subr.mxu0 0.0
  %154 = vmatpush1.msra.mxu0 0.0
  %155 = vmatprep.subr.mxu0 0.0
  %156 = vmatpush1.msra.mxu0 0.0
  %157 = vmatprep.subr.mxu0 0.0
  %158 = vmatpush1.msra.mxu0 0.0
  %159 = vmatprep.subr.mxu0 0.0
  %160 = vmatpush1.msra.mxu0 0.0
  %161 = vmatprep.subr.mxu0 0.0
  %162 = vmatpush1.msra.mxu0 0.0
  %163 = vmatprep.subr.mxu0 0.0
  %164 = vmatpush1.msra.mxu0 0.0
  %165 = vmatprep.subr.mxu0 0.0
  %166 = vmatpush1.msra.mxu0 0.0
  %167 = vmatprep.subr.mxu0 0.0
  %168 = vmatpush1.msra.mxu0 0.0
  %169 = vmatprep.subr.mxu0 0.0
  %170 = vmatpush1.msra.mxu0 0.0
  %171 = vmatprep.subr.mxu0 0.0
  %172 = vmatpush1.msra.mxu0 0.0
  %173 = vmatprep.subr.mxu0 0.0
  %174 = vmatpush1.msra.mxu0 0.0
  %175 = vmatprep.subr.mxu0 0.0
  %176 = vmatpush1.msra.mxu0 0.0
  %177 = vmatprep.subr.mxu0 0.0
  %178 = vmatpush1.msra.mxu0 %v111
  %179 = vmatprep.subr.mxu0 0.0
  %180 = vmatpush1.msra.mxu0 %v110
  %181 = vmatprep.subr.mxu0 0.0
  %182 = vmatpush1.msra.mxu0 %v109
  %183 = vmatprep.subr.mxu0 0.0
  %184 = vmatpush1.msra.mxu0 %v108
  %185 = vmatprep.subr.mxu0 0.0
  %186 = vmatpush2.msra.mxu0 0.0
  %187 = vmatprep.subr.mxu0 0.0
  %188 = vmatpush2.msra.mxu0 0.0
  %189 = vmatprep.subr.mxu0 0.0
  %190 = vmatpush2.msra.mxu0 0.0
  %191 = vmatprep.subr.mxu0 0.0
  %192 = vmatpush2.msra.mxu0 0.0
  %193 = vmatprep.subr.mxu0 0.0
  %194 = vmatpush2.msra.mxu0 0.0
  %195 = vmatprep.subr.mxu0 0.0
  %196 = vmatpush2.msra.mxu0 0.0
  %197 = vmatprep.subr.mxu0 0.0
  %198 = vmatpush2.msra.mxu0 0.0
  %199 = vmatprep.subr.mxu0 0.0
  %200 = vmatpush2.msra.mxu0 0.0
  %201 = vmatprep.subr.mxu0 0.0
  %202 = vmatpush2.msra.mxu0 0.0
  %203 = vmatprep.subr.mxu0 0.0
  %204 = vmatpush2.msra.mxu0 0.0
  %205 = vmatprep.subr.mxu0 0.0
  %206 = vmatpush2.msra.mxu0 0.0
  %207 = vmatprep.subr.mxu0 0.0
  %208 = vmatpush2.msra.mxu0 0.0
  %209 = vmatprep.subr.mxu0 0.0
  %210 = vmatpush2.msra.mxu0 0.0
  %211 = vmatprep.subr.mxu0 0.0
  %212 = vmatpush2.msra.mxu0 0.0
  %213 = vmatprep.subr.mxu0 0.0
  %214 = vmatpush2.msra.mxu0 0.0
  %215 = vmatprep.subr.mxu0 0.0
  %216 = vmatpush2.msra.mxu0 0.0
  %217 = vmatprep.mubr.f32.mxu0 0.0
  %218 = vmatmul.mubr.f32.gmra.mxu0 %v142
  %v219 = vpop.f32.mrf.mxu0
  %v220 = vadd.f32 %v123, %v219
  %v221 = vpop.f32.mrf.mxu0
  %222 = vmatprep.mubr.f32.mxu0 0.0
  %223 = vmatmul.mubr.f32.gmra.mxu0 %v145
  %v224 = vpop.f32.mrf.mxu0
  %v225 = vadd.f32 %v128, %v224
  %v226 = vpop.f32.mrf.mxu0
  %227 = vmatprep.mubr.f32.mxu0 0.0
  %228 = vmatmul.mubr.f32.gmra.mxu0 %v148
  %v229 = vpop.f32.mrf.mxu0
  %v230 = vadd.f32 %v133, %v229
  %v231 = vpop.f32.mrf.mxu0
  %232 = vmatprep.mubr.f32.mxu0 0.0
  %233 = vmatmul.mubr.f32.gmra.mxu0 %v151
  %v234 = vpop.f32.mrf.mxu0
  %v235 = vadd.f32 %v138, %v234
  %v236 = vpop.f32.mrf.mxu0
  %237 = vdwg.mxu0
  %v238 = vmul.f32 %v220, %v220
  %v239 = vmul.f32 %v225, %v225
  %v240 = vmul.f32 %v230, %v230
  %v241 = vmul.f32 %v235, %v235
  %v242 = vadd.f32 %v238, %v239
  %v243 = vadd.f32 %v242, %v240
  %v244 = vadd.f32 %v243, %v241
  %v245 = vrot.slane %v244, 4
  %v246 = vadd.f32 %v244, %v245
  %v247 = vrot.slane %v246, 2
  %v248 = vadd.f32 %v246, %v247
  %v249 = vrot.slane %v248, 1
  %v250 = vadd.f32 %v248, %v249
  %v251 = vrcp.pop 32.0
  %v252 = vmul.f32 %v250, %v251
  %v253 = vadd.f32 %v252, 1e-12
  %v254 = vrsqrt.pop %v253
  %v255 = vmul.f32 %v220, %v254
  %v256 = vmul.f32 %v225, %v254
  %v257 = vmul.f32 %v230, %v254
  %v258 = vmul.f32 %v235, %v254
  %259 = vset.pattern.permute.xlu0 1
  %260 = vperm.xlu0 %259, %v116
  %v261 = vpop.permute.xlu0 %260
  %263 = vset.pattern.permute.xlu0 1
  %264 = vperm.xlu0 %263, %v117
  %v265 = vpop.permute.xlu0 %264
  %267 = vset.pattern.permute.xlu0 1
  %268 = vperm.xlu0 %267, %v118
  %v269 = vpop.permute.xlu0 %268
  %271 = vset.pattern.permute.xlu0 1
  %272 = vperm.xlu0 %271, %v119
  %v273 = vpop.permute.xlu0 %272
  %v275 = vmul.f32 %v255, %v261
  %v276 = vmul.f32 %v256, %v265
  %v277 = vmul.f32 %v257, %v269
  %v278 = vmul.f32 %v258, %v273
  %v279 = vmax.f32 %v275, 0.0
  %v280 = vmax.f32 %v276, 0.0
  %v281 = vmax.f32 %v277, 0.0
  %v282 = vmax.f32 %v278, 0.0
  %283 = vrot.lane.b32.xlu0 %v279, 1
  %v284 = vpop.permute.xlu0 %283
  %285 = vrot.lane.b32.xlu0 %v280, 1
  %v286 = vpop.permute.xlu0 %285
  %287 = vrot.lane.b32.xlu0 %v281, 1
  %v288 = vpop.permute.xlu0 %287
  %289 = vrot.lane.b32.xlu0 %v282, 1
  %v290 = vpop.permute.xlu0 %289
  %v291 = vmul.f32 %v284, %v39
  %v292 = vmul.f32 %v286, %v39
  %v293 = vmul.f32 %v288, %v39
  %v294 = vmul.f32 %v290, %v39
  %295 = vrot.lane.b32.xlu0 %v279, 127
  %v296 = vpop.permute.xlu0 %295
  %297 = vrot.lane.b32.xlu0 %v280, 127
  %v298 = vpop.permute.xlu0 %297
  %299 = vrot.lane.b32.xlu0 %v281, 127
  %v300 = vpop.permute.xlu0 %299
  %301 = vrot.lane.b32.xlu0 %v282, 127
  %v302 = vpop.permute.xlu0 %301
  %v303 = vmul.f32 %v296, %v55
  %v304 = vmul.f32 %v298, %v55
  %v305 = vmul.f32 %v300, %v55
  %v306 = vmul.f32 %v302, %v55
  %307 = vrot.lane.b32.xlu0 %v279, 8
  %v308 = vpop.permute.xlu0 %307
  %309 = vrot.lane.b32.xlu0 %v280, 8
  %v310 = vpop.permute.xlu0 %309
  %311 = vrot.lane.b32.xlu0 %v281, 8
  %v312 = vpop.permute.xlu0 %311
  %313 = vrot.lane.b32.xlu0 %v282, 8
  %v314 = vpop.permute.xlu0 %313
  %v315 = vmul.f32 %v308, %v71
  %v316 = vmul.f32 %v310, %v71
  %v317 = vmul.f32 %v312, %v71
  %v318 = vmul.f32 %v314, %v71
  %319 = vrot.lane.b32.xlu0 %v279, 120
  %v320 = vpop.permute.xlu0 %319
  %321 = vrot.lane.b32.xlu0 %v280, 120
  %v322 = vpop.permute.xlu0 %321
  %323 = vrot.lane.b32.xlu0 %v281, 120
  %v324 = vpop.permute.xlu0 %323
  %325 = vrot.lane.b32.xlu0 %v282, 120
  %v326 = vpop.permute.xlu0 %325
  %v327 = vmul.f32 %v320, %v87
  %v328 = vmul.f32 %v322, %v87
  %v329 = vmul.f32 %v324, %v87
  %v330 = vmul.f32 %v326, %v87
  %v331 = vmul.f32 %v279, 2.0
  %v332 = vmul.f32 %v280, 2.0
  %v333 = vmul.f32 %v281, 2.0
  %v334 = vmul.f32 %v282, 2.0
  %v335 = vadd.f32 %v331, %v291
  %v336 = vadd.f32 %v332, %v292
  %v337 = vadd.f32 %v333, %v293
  %v338 = vadd.f32 %v334, %v294
  %v339 = vadd.f32 %v335, %v303
  %v340 = vadd.f32 %v336, %v304
  %v341 = vadd.f32 %v337, %v305
  %v342 = vadd.f32 %v338, %v306
  %v343 = vadd.f32 %v339, %v315
  %v344 = vadd.f32 %v340, %v316
  %v345 = vadd.f32 %v341, %v317
  %v346 = vadd.f32 %v342, %v318
  %v347 = vadd.f32 %v343, %v327
  %v348 = vadd.f32 %v344, %v328
  %v349 = vadd.f32 %v345, %v329
  %v350 = vadd.f32 %v346, %v330
  %v351 = vld [vmem:[%s4] sm:$0xff]
  %v352 = vld [vmem:[%s4 + $0x8] sm:$0xff]
  %v353 = vld [vmem:[%s5] sm:$0xff]
  %v354 = vld [vmem:[%s5 + $0x8] sm:$0xff]
  %356 = vset.pattern.permute.xlu0 0
  %357 = vperm.xlu0 %356, %v353
  %v358 = vpop.permute.xlu0 %357
  %361 = vset.pattern.permute.xlu0 0
  %362 = vperm.xlu0 %361, %v354
  %v363 = vpop.permute.xlu0 %362
  %v366 = vsel %vm140, %v351, 0
  %v369 = vsel %vm140, %v352, 0
  %371 = vmatprep.subr.mxu0 0.0
  %372 = vmatpush1.msra.mxu0 0.0
  %373 = vmatprep.subr.mxu0 0.0
  %374 = vmatpush1.msra.mxu0 0.0
  %375 = vmatprep.subr.mxu0 0.0
  %376 = vmatpush1.msra.mxu0 0.0
  %377 = vmatprep.subr.mxu0 0.0
  %378 = vmatpush1.msra.mxu0 0.0
  %379 = vmatprep.subr.mxu0 0.0
  %380 = vmatpush1.msra.mxu0 0.0
  %381 = vmatprep.subr.mxu0 0.0
  %382 = vmatpush1.msra.mxu0 0.0
  %383 = vmatprep.subr.mxu0 0.0
  %384 = vmatpush1.msra.mxu0 0.0
  %385 = vmatprep.subr.mxu0 0.0
  %386 = vmatpush1.msra.mxu0 0.0
  %387 = vmatprep.subr.mxu0 0.0
  %388 = vmatpush1.msra.mxu0 0.0
  %389 = vmatprep.subr.mxu0 0.0
  %390 = vmatpush1.msra.mxu0 0.0
  %391 = vmatprep.subr.mxu0 0.0
  %392 = vmatpush1.msra.mxu0 0.0
  %393 = vmatprep.subr.mxu0 0.0
  %394 = vmatpush1.msra.mxu0 0.0
  %395 = vmatprep.subr.mxu0 0.0
  %396 = vmatpush1.msra.mxu0 %v350
  %397 = vmatprep.subr.mxu0 0.0
  %398 = vmatpush1.msra.mxu0 %v349
  %399 = vmatprep.subr.mxu0 0.0
  %400 = vmatpush1.msra.mxu0 %v348
  %401 = vmatprep.subr.mxu0 0.0
  %402 = vmatpush1.msra.mxu0 %v347
  %403 = vmatprep.subr.mxu0 0.0
  %404 = vmatpush2.msra.mxu0 0.0
  %405 = vmatprep.subr.mxu0 0.0
  %406 = vmatpush2.msra.mxu0 0.0
  %407 = vmatprep.subr.mxu0 0.0
  %408 = vmatpush2.msra.mxu0 0.0
  %409 = vmatprep.subr.mxu0 0.0
  %410 = vmatpush2.msra.mxu0 0.0
  %411 = vmatprep.subr.mxu0 0.0
  %412 = vmatpush2.msra.mxu0 0.0
  %413 = vmatprep.subr.mxu0 0.0
  %414 = vmatpush2.msra.mxu0 0.0
  %415 = vmatprep.subr.mxu0 0.0
  %416 = vmatpush2.msra.mxu0 0.0
  %417 = vmatprep.subr.mxu0 0.0
  %418 = vmatpush2.msra.mxu0 0.0
  %419 = vmatprep.subr.mxu0 0.0
  %420 = vmatpush2.msra.mxu0 0.0
  %421 = vmatprep.subr.mxu0 0.0
  %422 = vmatpush2.msra.mxu0 0.0
  %423 = vmatprep.subr.mxu0 0.0
  %424 = vmatpush2.msra.mxu0 0.0
  %425 = vmatprep.subr.mxu0 0.0
  %426 = vmatpush2.msra.mxu0 0.0
  %427 = vmatprep.subr.mxu0 0.0
  %428 = vmatpush2.msra.mxu0 0.0
  %429 = vmatprep.subr.mxu0 0.0
  %430 = vmatpush2.msra.mxu0 0.0
  %431 = vmatprep.subr.mxu0 0.0
  %432 = vmatpush2.msra.mxu0 0.0
  %433 = vmatprep.subr.mxu0 0.0
  %434 = vmatpush2.msra.mxu0 0.0
  %435 = vmatprep.mubr.f32.mxu0 0.0
  %436 = vmatmul.mubr.f32.gmra.mxu0 %v366
  %v437 = vpop.f32.mrf.mxu0
  %v438 = vadd.f32 %v358, %v437
  %v439 = vpop.f32.mrf.mxu0
  %440 = vmatprep.mubr.f32.mxu0 0.0
  %441 = vmatmul.mubr.f32.gmra.mxu0 %v369
  %v442 = vpop.f32.mrf.mxu0
  %v443 = vadd.f32 %v363, %v442
  %v444 = vpop.f32.mrf.mxu0
  %445 = vdwg.mxu0
  %v446 = vmul.f32 %v438, %v438
  %v447 = vmul.f32 %v443, %v443
  %v448 = vadd.f32 %v446, %v447
  %v449 = vrot.slane %v448, 4
  %v450 = vadd.f32 %v448, %v449
  %v451 = vrot.slane %v450, 2
  %v452 = vadd.f32 %v450, %v451
  %v453 = vrot.slane %v452, 1
  %v454 = vadd.f32 %v452, %v453
  %v455 = vrcp.pop 16.0
  %v456 = vmul.f32 %v454, %v455
  %v457 = vadd.f32 %v456, 1e-12
  %v458 = vrsqrt.pop %v457
  %v459 = vmul.f32 %v438, %v458
  %v460 = vmul.f32 %v443, %v458
  %461 = vset.pattern.permute.xlu0 1
  %462 = vperm.xlu0 %461, %v353
  %v463 = vpop.permute.xlu0 %462
  %465 = vset.pattern.permute.xlu0 1
  %466 = vperm.xlu0 %465, %v354
  %v467 = vpop.permute.xlu0 %466
  %v469 = vmul.f32 %v459, %v463
  %v470 = vmul.f32 %v460, %v467
  %v471 = vmax.f32 %v469, 0.0
  %v472 = vmax.f32 %v470, 0.0
  %473 = vst [vmem:[%s6] sm:$0xff] %v471
  %474 = vst [vmem:[%s6 + $0x8] sm:$0xff] %v472
  // Predicated region
  $region26: #{gat_forward.1} parent=0 // pred_check
    _
  $region27: #{gat_forward.1} parent=0 // pred_check_branch
    %476 = sbr.rel (0) target = $region29
  $region28: #{gat_forward.1} parent=0 // pred_region
    _
  $region29: #{gat_forward.1} parent=0 // pred_fallthru
    _
  // Predicated region
  $region30: #{gat_forward.1} parent=0 // pred_check
    _
  $region31: #{gat_forward.1} parent=0 // pred_check_branch
    %478 = sbr.rel (0) target = $region33
  $region32: #{gat_forward.1} parent=0 // pred_region
    _
  $region33: #{gat_forward.1} parent=0 // pred_fallthru
    _

</llo_original>
